<compile_context>
chip_gen: v7x
topology: tpu7x:2x2x1
jax: 0.10.0
libtpu: 0.0.40
codegen_flags: <defaults>
</compile_context>

<pallas_src>
import functools

import jax
import jax.numpy as jnp
from jax.experimental import pallas as pl
from jax.experimental.pallas import tpu as pltpu


def _cd_partial_kernel(sr_ref, hr_ref, part_ref, *, w: int, dw: int):
    """One grid step: partial sum of ||d_sr| - |d_hr|| over a (TB, H*W) slab.

    sr_ref / hr_ref: (TB, H*W) blocks, lane-dense (flat index h*W + w).
    part_ref:        (1, 1) f32 SMEM slot, unique per grid step (no carried
                     dependency -> grid axis can be "parallel").
    """
    # Vertical finite difference == lane-axis shift by W in the flattened view.
    d_sr = jnp.abs(sr_ref[:, pl.ds(w, dw)] - sr_ref[:, pl.ds(0, dw)])
    d_hr = jnp.abs(hr_ref[:, pl.ds(w, dw)] - hr_ref[:, pl.ds(0, dw)])
    t = jnp.abs(d_sr - d_hr).astype(jnp.float32)
    part_ref[0, 0] = jnp.sum(t)


def _pick_batch_tile(b: int, hw: int, itemsize: int,
                     target_block_bytes: int = 2 * 1024 * 1024) -> int:
    """Largest divisor of b whose (tb, hw) block is <= ~target_block_bytes."""
    tb = max(1, target_block_bytes // max(1, hw * itemsize))
    tb = min(tb, b)
    while b % tb != 0:   # shrink to a divisor of b -> no padding / masking
        tb -= 1
    return tb


def cd_loss(sr: jax.Array, hr: jax.Array) -> jax.Array:
    """Pallas implementation of CDLoss.forward for NCHW inputs."""
    assert sr.shape == hr.shape, "sr and hr must have the same shape"
    n, c, h, w = sr.shape

    if h < 2:
        # torch.mean over an empty tensor -> nan; mirror that instead of 0/0.
        return jnp.float32(jnp.nan)

    b = n * c
    hw = h * w
    dw = (h - 1) * w

    # Free reshapes (row-major contiguous): last dim is lane-dense H*W.
    sr2 = sr.reshape(b, hw)
    hr2 = hr.reshape(b, hw)

    itemsize = jnp.dtype(sr.dtype).itemsize
    tb = _pick_batch_tile(b, hw, itemsize)
    g = b // tb

    # TODO(synk): for very large images (H*W*itemsize >> a few MiB) add a
    # second grid axis over H-tiles with a 1-row halo so a single (1, H*W)
    # block never exceeds the per-core VMEM budget (critical on v7x's 64 MiB).

    kernel = functools.partial(_cd_partial_kernel, w=w, dw=dw)

    partials = pl.pallas_call(
        kernel,
        out_shape=jax.ShapeDtypeStruct((g, 1), jnp.float32),
        grid_spec=pltpu.PrefetchScalarGridSpec(
            num_scalar_prefetch=0,
            grid=(g,),
            in_specs=[
                pl.BlockSpec((tb, hw), lambda i: (i, 0)),
                pl.BlockSpec((tb, hw), lambda i: (i, 0)),
            ],
            out_specs=pl.BlockSpec(
                (1, 1), lambda i: (i, 0), memory_space=pltpu.SMEM
            ),
        ),
        compiler_params=pltpu.CompilerParams(
            # Independent per-step outputs -> safe to shard across TCs (v7x).
            dimension_semantics=("parallel",),
        ),
    )(sr2, hr2)

    count = jnp.float32(b * dw)  # N * C * (H-1) * W
    return (jnp.sum(partials) / count).astype(jnp.float32)


def cd_loss_ref(sr: jax.Array, hr: jax.Array) -> jax.Array:
    """Pure-JAX reference for correctness check."""
    dsr = jnp.abs(sr[:, :, 1:, :] - sr[:, :, :-1, :])
    dhr = jnp.abs(hr[:, :, 1:, :] - hr[:, :, :-1, :])
    return jnp.mean(jnp.abs(dsr - dhr))


if __name__ == "__main__":
    key = jax.random.PRNGKey(0)
    k1, k2 = jax.random.split(key)

    # Small NCHW inputs consistent with an SR loss: batch=2, channels=4, 16x16.
    sr = jax.random.normal(k1, (2, 4, 16, 16), dtype=jnp.float32)
    hr = jax.random.normal(k2, (2, 4, 16, 16), dtype=jnp.float32)

    loss = jax.block_until_ready(cd_loss(sr, hr))
    ref = jax.block_until_ready(cd_loss_ref(sr, hr))

    assert jnp.allclose(loss, ref, rtol=1e-5, atol=1e-5), (loss, ref)
    print("KERNEL_OK")
</pallas_src>

<mosaic_0001>
module attributes {stable_mosaic.version = 11 : i64} {
  func.func @_cd_partial_kernel(%arg0: i32, %arg1: memref<8x256xf32, #tpu.memory_space<vmem>>, %arg2: memref<8x256xf32, #tpu.memory_space<vmem>>, %arg3: memref<1x1xf32, #tpu.memory_space<smem>>) attributes {dimension_semantics = [#tpu.dimension_semantics<parallel>], iteration_bounds = array<i64: 1>, scalar_prefetch = 0 : i64, scratch_operands = 0 : i64, tpu.core_type = #tpu.core_type<tc>, window_params = [{transform_indices = @transform_0, window_bounds = array<i64: 8, 256>}, {transform_indices = @transform_1, window_bounds = array<i64: 8, 256>}, {transform_indices = @transform_2, window_bounds = array<i64: 1, 1>}]} {
    %c0 = arith.constant 0 : index
    %c16 = arith.constant 16 : index
    %0 = vector.load %arg1[%c0, %c16] : memref<8x256xf32, #tpu.memory_space<vmem>>, vector<8x240xf32>
    %c0_0 = arith.constant 0 : index
    %c0_1 = arith.constant 0 : index
    %1 = vector.load %arg1[%c0_0, %c0_1] : memref<8x256xf32, #tpu.memory_space<vmem>>, vector<8x240xf32>
    %2 = arith.subf %0, %1 : vector<8x240xf32>
    %3 = math.absf %2 : vector<8x240xf32>
    %c0_2 = arith.constant 0 : index
    %c16_3 = arith.constant 16 : index
    %4 = vector.load %arg2[%c0_2, %c16_3] : memref<8x256xf32, #tpu.memory_space<vmem>>, vector<8x240xf32>
    %c0_4 = arith.constant 0 : index
    %c0_5 = arith.constant 0 : index
    %5 = vector.load %arg2[%c0_4, %c0_5] : memref<8x256xf32, #tpu.memory_space<vmem>>, vector<8x240xf32>
    %6 = arith.subf %4, %5 : vector<8x240xf32>
    %7 = math.absf %6 : vector<8x240xf32>
    %8 = arith.subf %3, %7 : vector<8x240xf32>
    %9 = math.absf %8 : vector<8x240xf32>
    %10 = vector.shape_cast %9 : vector<8x240xf32> to vector<1x8x240xf32>
    %cst = arith.constant dense<0.000000e+00> : vector<1xf32>
    %11 = vector.multi_reduction <add>, %10, %cst [1, 2] : vector<1x8x240xf32> to vector<1xf32>
    %12 = vector.shape_cast %11 : vector<1xf32> to vector<1x1x1xf32>
    %13 = vector.extract %12[0, 0, 0] : f32 from vector<1x1x1xf32>
    %c0_6 = arith.constant 0 : index
    %c0_7 = arith.constant 0 : index
    %14 = memref.load %arg3[%c0_6, %c0_7] : memref<1x1xf32, #tpu.memory_space<smem>>
    memref.store %13, %arg3[%c0_6, %c0_7] : memref<1x1xf32, #tpu.memory_space<smem>>
    return
  }
  func.func @transform_0(%arg0: i32) -> (i32, i32) {
    %c0_i32 = arith.constant 0 : i32
    %c0_i32_0 = arith.constant 0 : i32
    return %arg0, %c0_i32 : i32, i32
  }
  func.func @transform_1(%arg0: i32) -> (i32, i32) {
    %c0_i32 = arith.constant 0 : i32
    %c0_i32_0 = arith.constant 0 : i32
    return %arg0, %c0_i32 : i32, i32
  }
  func.func @transform_2(%arg0: i32) -> (i32, i32) {
    %c0_i32 = arith.constant 0 : i32
    %c0_i32_0 = arith.constant 0 : i32
    return %arg0, %c0_i32 : i32, i32
  }
}

</mosaic_0001>

<llo_original>
// kernel: tpu_custom_call.1
$region0: #{tpu_custom_call.1}
  #allocation0 [shape = 'u32[]', space=smem, size = 0x4, offset = 0x4, fixed_abs, tag = 'smem constant byte address 0x4 - core index']
  #allocation1 [shape = 'u32[144,128]{1,0:T(1,128)}', space=vmem, size = 0x12000, scoped, tag = 'internal scratch']
  %s0 = inlined_call_operand.hbm [shape: f32[8,256], index: 0, kind: input, shape index: {}]
  %s1 = inlined_call_operand.hbm [shape: f32[8,256], index: 1, kind: input, shape index: {}]
  %s2 = inlined_call_operand.hbm [shape: f32[1,1], index: 2, kind: output, shape index: {}]
  %s3 = sld [smem:[#allocation0]]
  $region26: #{tpu_custom_call.1} parent=0
    _
  %s5 = ssub.s32 1, %s3
  %s6 = scalar_select 0, %s5, %s3
  $region1: #{tpu_custom_call.1} parent=0
    #allocation2 [shape = 'u8[8192]{0}', space=vmem, size = 0x2000, scoped, tag = 'input window, operand 0, single buffered']
    #allocation3 [shape = 's32[1]{0}', space=sflag, size = 0x4, scoped, tag = 'scoped memory for tpu_custom_call.1']
    #allocation4 [shape = 's32[1]{0}', space=sflag, size = 0x4, scoped, tag = 'scoped memory for tpu_custom_call.1']
    #allocation5 [shape = 'u8[8192]{0}', space=vmem, size = 0x2000, scoped, tag = 'input window, operand 1, single buffered']
    #allocation6 [shape = 's32[1]{0}', space=sflag, size = 0x4, scoped, tag = 'scoped memory for tpu_custom_call.1']
    #allocation7 [shape = 'u8[512]{0}', space=smem, size = 0x200, scoped, tag = 'output window, operand 0, single buffered']
    %7 = vsyncpa [#allocation3], 0
    %8 = vsyncpa [#allocation6], 0
    %9 = vsyncpa [#allocation4], 0
    // Predicated region
    $region2: #{tpu_custom_call.1} parent=1 // pred_check
      _
    $region3: #{tpu_custom_call.1} parent=1 // pred_check_branch
      %11 = sbr.rel (0) target = $region5
    $region4: #{tpu_custom_call.1} parent=1 // pred_region
      %s13 = ssub.s32 256, 256
      %14 = vsyncadd [#allocation3], %s13
      %s16 = sshll.u32 [#allocation2], 4
      %s17 = int_to_ptr.vmem [resolvable:$true] %s16
      %19 = dma.hbm_to_vmem [thread:$0]  %s0, 256, %s17, [#allocation3]
    $region5: #{tpu_custom_call.1} parent=1 // pred_fallthru
      _
    // Predicated region
    $region6: #{tpu_custom_call.1} parent=1 // pred_check
      _
    $region7: #{tpu_custom_call.1} parent=1 // pred_check_branch
      %21 = sbr.rel (0) target = $region9
    $region8: #{tpu_custom_call.1} parent=1 // pred_region
      %s23 = ssub.s32 256, 256
      %24 = vsyncadd [#allocation6], %s23
      %s26 = sshll.u32 [#allocation5], 4
      %s27 = int_to_ptr.vmem [resolvable:$true] %s26
      %29 = dma.hbm_to_vmem [thread:$0]  %s1, 256, %s27, [#allocation6]
    $region9: #{tpu_custom_call.1} parent=1 // pred_fallthru
      _
    // Predicated region
    $region10: #{tpu_custom_call.1} parent=1 // pred_check
      _
    $region11: #{tpu_custom_call.1} parent=1 // pred_check_branch
      %31 = sbr.rel (0) target = $region13
    $region12: #{tpu_custom_call.1} parent=1 // pred_region
      %32 = dma.done [#allocation3], 256
    $region13: #{tpu_custom_call.1} parent=1 // pred_fallthru
      _
    // Predicated region
    $region14: #{tpu_custom_call.1} parent=1 // pred_check
      _
    $region15: #{tpu_custom_call.1} parent=1 // pred_check_branch
      %34 = sbr.rel (0) target = $region17
    $region16: #{tpu_custom_call.1} parent=1 // pred_region
      %35 = dma.done [#allocation6], 256
    $region17: #{tpu_custom_call.1} parent=1 // pred_fallthru
      _
    %v36 = vld [vmem:[#allocation2] sm:$0xff]
    %v37 = vld [vmem:[#allocation2 + $0x8] sm:$0xff]
    %40 = vrot.lane.b32.xlu0 %v36, 16
    %v41 = vpop.permute.xlu0 %40
    %42 = vrot.lane.b32.xlu0 %v37, 16
    %v43 = vpop.permute.xlu0 %42
    %vm44 = vcmask 130048
    %v45 = vsel %vm44, %v41, %v43
    %v48 = vsub.f32 %v36, %v41
    %v49 = vsub.f32 %v37, %v45
    %v50 = vand.u32 2147483647, %v48
    %v51 = vand.u32 2147483647, %v49
    %v52 = vld [vmem:[#allocation5] sm:$0xff]
    %v53 = vld [vmem:[#allocation5 + $0x8] sm:$0xff]
    %56 = vrot.lane.b32.xlu0 %v52, 16
    %v57 = vpop.permute.xlu0 %56
    %58 = vrot.lane.b32.xlu0 %v53, 16
    %v59 = vpop.permute.xlu0 %58
    %v60 = vsel %vm44, %v57, %v59
    %v63 = vsub.f32 %v52, %v57
    %v64 = vsub.f32 %v53, %v60
    %v65 = vand.u32 2147483647, %v63
    %v66 = vand.u32 2147483647, %v64
    %v67 = vsub.f32 %v50, %v65
    %v68 = vsub.f32 %v51, %v66
    %v69 = vand.u32 2147483647, %v67
    %v70 = vand.u32 2147483647, %v68
    %73 = vrot.lane.b32.xlu0 %v69, 112
    %v74 = vpop.permute.xlu0 %73
    %75 = vrot.lane.b32.xlu0 %v70, 112
    %v76 = vpop.permute.xlu0 %75
    %vm77 = vcmask 916480
    %v78 = vsel %vm77, %v74, %v76
    %v81 = vsel %vm77, %v76, 0.0
    %v82 = vadd.f32 %v78, %v81
    %83 = vadd.xlane.f32.xlu0 %v82
    %v84 = vpop.xlane.xlu0 %83
    %v85 = vrot.slane %v84, 4
    %v86 = vadd.f32 %v84, %v85
    %v87 = vrot.slane %v86, 2
    %v88 = vadd.f32 %v86, %v87
    %v89 = vrot.slane %v88, 1
    %v90 = vadd.f32 %v88, %v89
    %s91 = vtos %v90
    %s92 = scalar_lea.smem [#allocation7], 0
    %93 = sst [smem:[%s92]] %s91
    // Predicated region
    $region18: #{tpu_custom_call.1} parent=1 // pred_check
      _
    $region19: #{tpu_custom_call.1} parent=1 // pred_check_branch
      %95 = sbr.rel (0) target = $region21
    $region20: #{tpu_custom_call.1} parent=1 // pred_region
      %s97 = ssub.s32 16, 16
      %98 = vsyncadd [#allocation4], %s97
      %101 = dma.smem_to_hbm [#allocation7], 16, %s2, [#allocation4]
    $region21: #{tpu_custom_call.1} parent=1 // pred_fallthru
      _
    // Predicated region
    $region22: #{tpu_custom_call.1} parent=1 // pred_check
      _
    $region23: #{tpu_custom_call.1} parent=1 // pred_check_branch
      %103 = sbr.rel (0) target = $region25
    $region24: #{tpu_custom_call.1} parent=1 // pred_region
      %104 = dma.done [#allocation4], 16
    $region25: #{tpu_custom_call.1} parent=1 // pred_fallthru
      _
    %105 = sfence
    %106 = vsyncpa [#allocation3], 1
    %107 = vsyncpa [#allocation6], 1
    %108 = vsyncpa [#allocation4], 1

</llo_original>
